<compile_context>
chip_gen: v6e
topology: v6e:2x2x1
jax: 0.10.0
libtpu: 0.0.40
codegen_flags: <defaults>
</compile_context>

<pallas_src>
import jax
import jax.numpy as jnp
from jax.experimental import pallas as pl
from jax.experimental.pallas import tpu as pltpu


# ---------------------------------------------------------------------------
# In-kernel helpers
# ---------------------------------------------------------------------------
def _shift_with_halo(cur, halo, shift, hw, side):
    """Shifted tap of `cur` along lanes; wrapped boundary lanes come from `halo`.

    cur:  (C, TL) current tile, compute dtype (TL % 128 == 0, TL >= hw)
    halo: (C, hw) neighbouring-tile block (already zero-masked at sequence edges)
    side == 'left'  -> tap[:, j] = x[:, j - shift]   (halo = tail of previous tile)
    side == 'right' -> tap[:, j] = x[:, j + shift]   (halo = head of next tile)
    Rolls run on the XLU; only one 128-lane chunk gets a select patch.
    """
    C, TL = cur.shape
    lane = jax.lax.broadcasted_iota(jnp.int32, (C, hw), 1)
    if side == 'left':
        rolled = pltpu.roll(cur, shift=shift, axis=1)        # [j] = cur[j - shift]
        h_roll = pltpu.roll(halo, shift=shift, axis=1)       # [j<shift] = halo[hw-shift+j]
        head = rolled[:, :hw] if TL > hw else rolled
        head = jnp.where(lane < shift, h_roll, head)
        if TL > hw:
            return jnp.concatenate([head, rolled[:, hw:]], axis=1)
        return head
    else:
        rolled = pltpu.roll(cur, shift=TL - shift, axis=1)   # [j] = cur[(j+shift) mod TL]
        h_roll = pltpu.roll(halo, shift=hw - shift, axis=1)  # [j>=hw-shift] = halo[j+shift-hw]
        tail = rolled[:, TL - hw:] if TL > hw else rolled
        tail = jnp.where(lane >= hw - shift, h_roll, tail)
        if TL > hw:
            return jnp.concatenate([rolled[:, :TL - hw], tail], axis=1)
        return tail


def _taps_via_window(cur, lh, rh, K, pad_l, pad_r):
    """Fallback tap construction (tiny / non-128-aligned single-tile sequences)."""
    C, TL = cur.shape
    pieces = []
    if pad_l:
        pieces.append(lh[:, lh.shape[1] - pad_l:])
    pieces.append(cur)
    if pad_r:
        pieces.append(rh[:, :pad_r])
    window = jnp.concatenate(pieces, axis=1) if len(pieces) > 1 else cur
    return [window[:, k:k + TL] for k in range(K)]


def _make_residual_conv1d_kernel(*, K, pad_l, pad_r, hw, merged, use_roll):
    def kernel(x_ref, lh_ref, rh_ref, w_ref, b_ref, o_ref):
        t = pl.program_id(1)
        n_t = pl.num_programs(1)
        cur = x_ref[0]                         # (C, TL), compute dtype
        C, TL = cur.shape

        # Halo blocks; zeroed at the global sequence edges -> exact 'same' zero padding.
        lh = lh_ref[0]
        rh = rh_ref[0]
        if pad_l > 0:
            lh = jnp.where(t > 0, lh, jnp.zeros_like(lh))
        if pad_r > 0:
            rh = jnp.where(t < n_t - 1, rh, jnp.zeros_like(rh))

        # K shifted taps, kept in the compute dtype (no f32 cast passes).
        if use_roll:
            taps = []
            for k in range(K):
                d = k - pad_l
                if d == 0:
                    taps.append(cur)
                elif d < 0:
                    taps.append(_shift_with_halo(cur, lh, -d, hw, 'left'))
                else:
                    taps.append(_shift_with_halo(cur, rh, d, hw, 'right'))
        else:
            taps = _taps_via_window(cur, lh, rh, K, pad_l, pad_r)

        if merged:
            # Small K*C: one (Cout, K*Cin) x (K*Cin, TL) MXU contraction.
            im2col = jnp.concatenate(taps, axis=0) if K > 1 else taps[0]
            conv = jax.lax.dot_general(
                w_ref[...], im2col,
                dimension_numbers=(((1,), (0,)), ((), ())),
                preferred_element_type=jnp.float32)
        else:
            # Large C: K accumulating per-tap dots, no K*C x TL slab materialization.
            conv = None
            for k in range(K):
                part = jax.lax.dot_general(
                    w_ref[:, k * C:(k + 1) * C], taps[k],
                    dimension_numbers=(((1,), (0,)), ((), ())),
                    preferred_element_type=jnp.float32)
                conv = part if conv is None else conv + part

        # Fused f32 epilogue: bias + residual; single cast for the store.
        out = conv + b_ref[...].astype(jnp.float32) + cur.astype(jnp.float32)
        o_ref[0] = out.astype(o_ref.dtype)

    return kernel


# ---------------------------------------------------------------------------
# Wrapper
# ---------------------------------------------------------------------------
def _snap_tile(L, cand):
    """Largest 128-multiple <= cand that divides L (assumes L % 128 == 0)."""
    t = max((min(cand, L) // 128) * 128, 128)
    while L % t != 0:
        t -= 128
    return t


def _vmem_estimate(C, O, K, tl, hw, itemsize_x, itemsize_o, itemsize_w, merged):
    blk_in = C * tl * itemsize_x
    blk_hal = 2 * C * hw * itemsize_x
    blk_out = O * tl * itemsize_o
    wbytes = O * K * C * itemsize_w + O * 4
    pipelined = 2 * (blk_in + blk_hal + blk_out + wbytes)        # double-buffered blocks
    taps = K * C * tl * itemsize_x * (2 if merged else 1)        # taps (+ im2col slab)
    f32tmp = 2 * O * tl * 4                                      # conv acc + epilogue
    return pipelined + taps + f32tmp + (2 << 20)                 # + slack


def residual_conv1d(x_ncl, weight_oik, bias_o, *, l_tile=None, out_dtype=None,
                    block_byte_target=1 << 20):
    """forward(x) = Conv1d(x) + x, PyTorch NCL in / NCL out (stride 1, 'same' pad).

    x_ncl:      (B, C, L)       activations (f32 or bf16; bf16 halves HBM traffic)
    weight_oik: (Cout, Cin, K)  conv weight (weight_norm already folded)
    bias_o:     (Cout,)
    """
    B, C, L = x_ncl.shape
    O, I, K = weight_oik.shape
    assert I == C and O == C, "residual connection requires Cin == Cout"

    compute_dtype = x_ncl.dtype
    if out_dtype is None:
        out_dtype = x_ncl.dtype
    pad_l = (K - 1) // 2
    pad_r = K - 1 - pad_l

    itemsize_x = jnp.dtype(x_ncl.dtype).itemsize
    itemsize_o = jnp.dtype(out_dtype).itemsize
    itemsize_w = jnp.dtype(compute_dtype).itemsize
    merged = (K * C <= 256)

    # Generation-aware VMEM cap (v7x: 64 MiB physical; v5e/v6e: 128 MiB).
    try:
        vmem_cap = int(pltpu.get_tpu_info().vmem_capacity_bytes)
    except Exception:
        vmem_cap = 64 << 20
    soft_cap = min(int(0.40 * vmem_cap), 100 << 20)

    def est(tl, hw_):
        return _vmem_estimate(C, O, K, tl, hw_, itemsize_x, itemsize_o, itemsize_w, merged)

    # --- budget-driven L tile selection ---
    if L % 128 != 0:
        # Tiny / non-aligned sequences: single full-L tile (full-dim blocks are legal).
        if l_tile is None:
            l_tile = L
        hw = L
    else:
        hw = 128
        if l_tile is None:
            cand = max(block_byte_target // (C * itemsize_x), 128)
            l_tile = _snap_tile(L, cand)
            # Give v7x's second TensorCore work even when B == 1.
            if B == 1 and L // l_tile < 2 and L >= 256:
                l_tile = _snap_tile(L, L // 2)
            # Shrink until the double-buffered working set fits the generation cap.
            while est(l_tile, hw) > int(0.8 * soft_cap) and l_tile > 128:
                l_tile = _snap_tile(L, l_tile - 128)

    assert L % l_tile == 0
    assert l_tile % 128 == 0 or l_tile == L
    assert K - 1 <= min(l_tile, hw), "halo scheme assumes taps span at most adjacent tiles"
    n_t = L // l_tile
    use_roll = (l_tile % 128 == 0)
    lstep = l_tile // hw
    n_hw = L // hw

    vmem_limit = int(min(max(soft_cap, est(l_tile, hw) + (2 << 20)), int(0.9 * vmem_cap)))

    # Merged weight layout W2[o, k*Cin + i] = w[o, i, k]; bias as an f32 column.
    w2 = jnp.transpose(weight_oik, (0, 2, 1)).reshape(O, K * I).astype(compute_dtype)
    b2 = bias_o.reshape(O, 1).astype(jnp.float32)

    kernel = _make_residual_conv1d_kernel(
        K=K, pad_l=pad_l, pad_r=pad_r, hw=hw, merged=merged, use_roll=use_roll)

    out = pl.pallas_call(
        kernel,
        out_shape=jax.ShapeDtypeStruct((B, O, L), out_dtype),
        grid_spec=pltpu.PrefetchScalarGridSpec(
            num_scalar_prefetch=0,
            grid=(B, n_t),
            in_specs=[
                # Main input tile t.
                pl.BlockSpec((1, C, l_tile), lambda b, t: (b, 0, t)),
                # Left halo: last hw columns of tile t-1 (clamped & masked at t == 0).
                pl.BlockSpec((1, C, hw),
                             lambda b, t: (b, 0, jnp.maximum(t * lstep - 1, 0))),
                # Right halo: first hw columns of tile t+1 (clamped & masked at t == n_t-1).
                pl.BlockSpec((1, C, hw),
                             lambda b, t: (b, 0, jnp.minimum((t + 1) * lstep, n_hw - 1))),
                # Small weight / bias stay fully VMEM-resident (constant block index).
                pl.BlockSpec((O, K * I), lambda b, t: (0, 0)),
                pl.BlockSpec((O, 1), lambda b, t: (0, 0)),
            ],
            out_specs=pl.BlockSpec((1, O, l_tile), lambda b, t: (b, 0, t)),
        ),
        compiler_params=pltpu.CompilerParams(
            dimension_semantics=("parallel", "parallel"),
            vmem_limit_bytes=vmem_limit,
        ),
    )(x_ncl, x_ncl, x_ncl, w2, b2)
    return out


# ---------------------------------------------------------------------------
# Reference + tests
# ---------------------------------------------------------------------------
def _reference(x_ncl, weight_oik, bias_o):
    """Pure-JAX f32 reference: y = 'same'-padded Conv1d(x) + bias + x."""
    B, C, L = x_ncl.shape
    O, I, K = weight_oik.shape
    pad_l = (K - 1) // 2
    pad_r = K - 1 - pad_l
    x32 = x_ncl.astype(jnp.float32)
    w32 = weight_oik.astype(jnp.float32)
    xpad = jnp.pad(x32, ((0, 0), (0, 0), (pad_l, pad_r)))
    taps = jnp.stack([xpad[:, :, k:k + L] for k in range(K)], axis=-1)   # (B,I,L,K)
    conv = jnp.einsum('bilk,oik->bol', taps, w32) + bias_o.astype(jnp.float32)[None, :, None]
    return conv + x32


if __name__ == "__main__":
    key = jax.random.PRNGKey(0)
    k_x, k_w, k_b = jax.random.split(key, 3)

    B, C, K = 2, 8, 3
    w = jax.random.normal(k_w, (C, C, K), dtype=jnp.float32) * 0.1
    b = jax.random.normal(k_b, (C,), dtype=jnp.float32) * 0.1

    # --- Test 1: f32, default budget-driven tiling (single big tile here), merged MXU path.
    L = 1024
    x = jax.random.normal(k_x, (B, C, L), dtype=jnp.float32)
    y = jax.block_until_ready(residual_conv1d(x, w, b))
    assert y.shape == (B, C, L)
    assert jnp.allclose(y, _reference(x, w, b), rtol=1e-4, atol=1e-4)

    # --- Test 2: bf16 compute, many 128-lane tiles -> roll/halo patching across 7 interior
    # boundaries; f32 accumulate / epilogue / output.
    xb = x.astype(jnp.bfloat16)
    wb = w.astype(jnp.bfloat16)
    yb = jax.block_until_ready(
        residual_conv1d(xb, wb, b, l_tile=128, out_dtype=jnp.float32))
    assert jnp.allclose(yb, _reference(xb, wb, b), rtol=1e-3, atol=1e-3)

    # --- Test 3: B == 1 -> tile choice guarantees >= 2 L-tiles (both v7x TensorCores busy);
    # exercises the f32 roll/halo path with a real interior boundary.
    x1 = x[:1]
    y1 = jax.block_until_ready(residual_conv1d(x1, w, b))
    assert jnp.allclose(y1, _reference(x1, w, b), rtol=1e-4, atol=1e-4)

    # --- Test 4: large channel count -> per-tap accumulating MXU path (no K*C x TL slab).
    C2, L2 = 128, 512
    k_x2, k_w2, k_b2 = jax.random.split(jax.random.PRNGKey(1), 3)
    x_c2 = jax.random.normal(k_x2, (1, C2, L2), dtype=jnp.float32)
    w_c2 = jax.random.normal(k_w2, (C2, C2, K), dtype=jnp.float32) * 0.05
    b_c2 = jax.random.normal(k_b2, (C2,), dtype=jnp.float32) * 0.05
    y_c2 = jax.block_until_ready(residual_conv1d(x_c2, w_c2, b_c2, l_tile=128))
    assert jnp.allclose(y_c2, _reference(x_c2, w_c2, b_c2), rtol=1e-3, atol=1e-3)

    # --- Test 5: tiny, non-128-aligned sequence -> single full-L tile fallback path.
    L3 = 16
    x3 = jax.random.normal(k_x, (B, C, L3), dtype=jnp.float32)
    y3 = jax.block_until_ready(residual_conv1d(x3, w, b))
    assert jnp.allclose(y3, _reference(x3, w, b), rtol=1e-4, atol=1e-4)

    print("KERNEL_OK")
</pallas_src>

<mosaic_0001>
module attributes {stable_mosaic.version = 11 : i64} {
  func.func @kernel(%arg0: i32, %arg1: i32, %arg2: memref<1x8x1024xf32, #tpu.memory_space<vmem>>, %arg3: memref<1x8x128xf32, #tpu.memory_space<vmem>>, %arg4: memref<1x8x128xf32, #tpu.memory_space<vmem>>, %arg5: memref<8x24xf32, #tpu.memory_space<vmem>>, %arg6: memref<8x1xf32, #tpu.memory_space<vmem>>, %arg7: memref<1x8x1024xf32, #tpu.memory_space<vmem>>) attributes {dimension_semantics = [#tpu.dimension_semantics<parallel>, #tpu.dimension_semantics<parallel>], iteration_bounds = array<i64: 2, 1>, scalar_prefetch = 0 : i64, scratch_operands = 0 : i64, tpu.core_type = #tpu.core_type<tc>, window_params = [{transform_indices = @transform_0, window_bounds = array<i64: 1, 8, 1024>}, {transform_indices = @transform_1, window_bounds = array<i64: 1, 8, 128>}, {transform_indices = @transform_2, window_bounds = array<i64: 1, 8, 128>}, {pipeline_mode = #tpu.pipeline_mode<synchronous>, transform_indices = @transform_3, window_bounds = array<i64: 8, 24>}, {pipeline_mode = #tpu.pipeline_mode<synchronous>, transform_indices = @transform_4, window_bounds = array<i64: 8, 1>}, {transform_indices = @transform_5, window_bounds = array<i64: 1, 8, 1024>}]} {
    %c0 = arith.constant 0 : index
    %c0_0 = arith.constant 0 : index
    %c0_1 = arith.constant 0 : index
    %0 = vector.load %arg2[%c0, %c0_0, %c0_1] : memref<1x8x1024xf32, #tpu.memory_space<vmem>>, vector<1x8x1024xf32>
    %1 = vector.shape_cast %0 : vector<1x8x1024xf32> to vector<8x1024xf32>
    %c0_2 = arith.constant 0 : index
    %c0_3 = arith.constant 0 : index
    %c0_4 = arith.constant 0 : index
    %2 = vector.load %arg3[%c0_2, %c0_3, %c0_4] : memref<1x8x128xf32, #tpu.memory_space<vmem>>, vector<1x8x128xf32>
    %3 = vector.shape_cast %2 : vector<1x8x128xf32> to vector<8x128xf32>
    %c0_5 = arith.constant 0 : index
    %c0_6 = arith.constant 0 : index
    %c0_7 = arith.constant 0 : index
    %4 = vector.load %arg4[%c0_5, %c0_6, %c0_7] : memref<1x8x128xf32, #tpu.memory_space<vmem>>, vector<1x8x128xf32>
    %5 = vector.shape_cast %4 : vector<1x8x128xf32> to vector<8x128xf32>
    %c0_i32 = arith.constant 0 : i32
    %6 = arith.cmpi sgt, %arg1, %c0_i32 : i32
    %cst = arith.constant 0.000000e+00 : f32
    %7 = vector.broadcast %cst : f32 to vector<8x128xf32>
    %8 = arith.select %6, %3, %7 : vector<8x128xf32>
    %c0_i32_8 = arith.constant 0 : i32
    %9 = arith.cmpi slt, %arg1, %c0_i32_8 : i32
    %cst_9 = arith.constant 0.000000e+00 : f32
    %10 = vector.broadcast %cst_9 : f32 to vector<8x128xf32>
    %11 = arith.select %9, %5, %10 : vector<8x128xf32>
    %12 = tpu.iota {dimensions = array<i32: 1>} : vector<8x128xi32>
    %c1_i32 = arith.constant 1 : i32
    %13 = tpu.dynamic_rotate %1 by %c1_i32 dim 1 : vector<8x1024xf32>, i32 -> vector<8x1024xf32>
    %c1_i32_10 = arith.constant 1 : i32
    %14 = tpu.dynamic_rotate %8 by %c1_i32_10 dim 1 : vector<8x128xf32>, i32 -> vector<8x128xf32>
    %15 = vector.extract_strided_slice %13 {offsets = [0, 0], sizes = [8, 128], strides = [1, 1]} : vector<8x1024xf32> to vector<8x128xf32>
    %c1_i32_11 = arith.constant 1 : i32
    %16 = vector.broadcast %c1_i32_11 : i32 to vector<8x128xi32>
    %17 = arith.cmpi slt, %12, %16 : vector<8x128xi32>
    %18 = arith.select %17, %14, %15 : vector<8x128xi1>, vector<8x128xf32>
    %19 = vector.extract_strided_slice %13 {offsets = [0, 128], sizes = [8, 896], strides = [1, 1]} : vector<8x1024xf32> to vector<8x896xf32>
    %20 = tpu.concatenate %18, %19 in 1 : vector<8x128xf32>, vector<8x896xf32> -> vector<8x1024xf32>
    %21 = tpu.iota {dimensions = array<i32: 1>} : vector<8x128xi32>
    %c1023_i32 = arith.constant 1023 : i32
    %22 = tpu.dynamic_rotate %1 by %c1023_i32 dim 1 : vector<8x1024xf32>, i32 -> vector<8x1024xf32>
    %c127_i32 = arith.constant 127 : i32
    %23 = tpu.dynamic_rotate %11 by %c127_i32 dim 1 : vector<8x128xf32>, i32 -> vector<8x128xf32>
    %24 = vector.extract_strided_slice %22 {offsets = [0, 896], sizes = [8, 128], strides = [1, 1]} : vector<8x1024xf32> to vector<8x128xf32>
    %c127_i32_12 = arith.constant 127 : i32
    %25 = vector.broadcast %c127_i32_12 : i32 to vector<8x128xi32>
    %26 = arith.cmpi sge, %21, %25 : vector<8x128xi32>
    %27 = arith.select %26, %23, %24 : vector<8x128xi1>, vector<8x128xf32>
    %28 = vector.extract_strided_slice %22 {offsets = [0, 0], sizes = [8, 896], strides = [1, 1]} : vector<8x1024xf32> to vector<8x896xf32>
    %29 = tpu.concatenate %28, %27 in 1 : vector<8x896xf32>, vector<8x128xf32> -> vector<8x1024xf32>
    %30 = tpu.concatenate %20, %1, %29 in 0 : vector<8x1024xf32>, vector<8x1024xf32>, vector<8x1024xf32> -> vector<24x1024xf32>
    %c0_13 = arith.constant 0 : index
    %c0_14 = arith.constant 0 : index
    %31 = vector.load %arg5[%c0_13, %c0_14] : memref<8x24xf32, #tpu.memory_space<vmem>>, vector<8x24xf32>
    %cst_15 = arith.constant dense<0.000000e+00> : vector<8x1024xf32>
    %32 = tpu.matmul %31, %30, %cst_15 {dimension_numbers = #tpu.dot_dimension_numbers<[1], [0], [0], [1], [0, 0, 1, 1], [], []>} : vector<8x24xf32>, vector<24x1024xf32>, vector<8x1024xf32> -> vector<8x1024xf32>
    %c0_16 = arith.constant 0 : index
    %c0_17 = arith.constant 0 : index
    %33 = vector.load %arg6[%c0_16, %c0_17] : memref<8x1xf32, #tpu.memory_space<vmem>>, vector<8x1xf32>
    %34 = vector.broadcast %33 : vector<8x1xf32> to vector<8x1024xf32>
    %35 = arith.addf %32, %34 : vector<8x1024xf32>
    %36 = arith.addf %35, %1 : vector<8x1024xf32>
    %c0_18 = arith.constant 0 : index
    %c0_19 = arith.constant 0 : index
    %c0_20 = arith.constant 0 : index
    %37 = vector.load %arg7[%c0_18, %c0_19, %c0_20] : memref<1x8x1024xf32, #tpu.memory_space<vmem>>, vector<1x8x1024xf32>
    %38 = vector.shape_cast %37 : vector<1x8x1024xf32> to vector<8x1024xf32>
    %39 = vector.shape_cast %36 : vector<8x1024xf32> to vector<1x8x1024xf32>
    tpu.vector_store %arg7[%c0_18, %c0_19, %c0_20], %39 {strides = array<i32>} : memref<1x8x1024xf32, #tpu.memory_space<vmem>>, vector<1x8x1024xf32>,
    return
  }
  func.func @transform_0(%arg0: i32, %arg1: i32) -> (i32, i32, i32) {
    %c0_i32 = arith.constant 0 : i32
    %c0_i32_0 = arith.constant 0 : i32
    return %arg0, %c0_i32, %arg1 : i32, i32, i32
  }
  func.func @transform_1(%arg0: i32, %arg1: i32) -> (i32, i32, i32) {
    %c8_i32 = arith.constant 8 : i32
    %0 = arith.muli %arg1, %c8_i32 : i32
    %c1_i32 = arith.constant 1 : i32
    %1 = arith.subi %0, %c1_i32 : i32
    %c0_i32 = arith.constant 0 : i32
    %2 = arith.maxsi %1, %c0_i32 : i32
    %c0_i32_0 = arith.constant 0 : i32
    %c0_i32_1 = arith.constant 0 : i32
    return %arg0, %c0_i32_0, %2 : i32, i32, i32
  }
  func.func @transform_2(%arg0: i32, %arg1: i32) -> (i32, i32, i32) {
    %c1_i32 = arith.constant 1 : i32
    %0 = arith.addi %arg1, %c1_i32 : i32
    %c8_i32 = arith.constant 8 : i32
    %1 = arith.muli %0, %c8_i32 : i32
    %c7_i32 = arith.constant 7 : i32
    %2 = arith.minsi %1, %c7_i32 : i32
    %c0_i32 = arith.constant 0 : i32
    %c0_i32_0 = arith.constant 0 : i32
    return %arg0, %c0_i32, %2 : i32, i32, i32
  }
  func.func @transform_3(%arg0: i32, %arg1: i32) -> (i32, i32) {
    %c0_i32 = arith.constant 0 : i32
    %c0_i32_0 = arith.constant 0 : i32
    %c0_i32_1 = arith.constant 0 : i32
    return %c0_i32, %c0_i32_0 : i32, i32
  }
  func.func @transform_4(%arg0: i32, %arg1: i32) -> (i32, i32) {
    %c0_i32 = arith.constant 0 : i32
    %c0_i32_0 = arith.constant 0 : i32
    %c0_i32_1 = arith.constant 0 : i32
    return %c0_i32, %c0_i32_0 : i32, i32
  }
  func.func @transform_5(%arg0: i32, %arg1: i32) -> (i32, i32, i32) {
    %c0_i32 = arith.constant 0 : i32
    %c0_i32_0 = arith.constant 0 : i32
    return %arg0, %c0_i32, %arg1 : i32, i32, i32
  }
}

</mosaic_0001>

<llo_original>
// kernel: tpu_custom_call.1
$region0: #{tpu_custom_call.1}
  #allocation0 [shape = 'u32[]', space=smem, size = 0x4, offset = 0x4, fixed_abs, tag = 'smem constant byte address 0x4 - core index']
  #allocation1 [shape = 'u32[144,128]{1,0:T(1,128)}', space=vmem, size = 0x12000, scoped, tag = 'internal scratch']
  %s0 = inlined_call_operand.hbm [shape: f32[2,8,1024], index: 0, kind: input, shape index: {}]
  %s1 = inlined_call_operand.hbm [shape: f32[2,8,1024], index: 1, kind: input, shape index: {}]
  %s2 = inlined_call_operand.hbm [shape: f32[2,8,1024], index: 2, kind: input, shape index: {}]
  %s3 = inlined_call_operand.vmem [shape: f32[8,24], index: 3, kind: input, shape index: {}]
  %s4 = inlined_call_operand.vmem [shape: f32[8,1], index: 4, kind: input, shape index: {}]
  %s5 = inlined_call_operand.hbm [shape: f32[2,8,1024], index: 5, kind: output, shape index: {}]
  %s6 = sld [smem:[#allocation0]]
  $region65: #{tpu_custom_call.1} parent=0
    _
  %s8 = ssub.s32 1, %s6
  %s9 = scalar_select 0, %s8, %s6
  $region1: #{tpu_custom_call.1} parent=0
    #allocation2 [shape = 'u8[65536]{0}', space=vmem, size = 0x10000, scoped, tag = 'input window, operand 0']
    #allocation3 [shape = 's32[2]{0}', space=sflag, size = 0x8, scoped, tag = 'scoped memory for tpu_custom_call.1']
    #allocation4 [shape = 's32[2]{0}', space=sflag, size = 0x8, scoped, tag = 'scoped memory for tpu_custom_call.1']
    #allocation5 [shape = 'u8[8192]{0}', space=vmem, size = 0x2000, scoped, tag = 'input window, operand 1']
    #allocation6 [shape = 's32[2]{0}', space=sflag, size = 0x8, scoped, tag = 'scoped memory for tpu_custom_call.1']
    #allocation7 [shape = 'u8[8192]{0}', space=vmem, size = 0x2000, scoped, tag = 'input window, operand 2']
    #allocation8 [shape = 'u8[65536]{0}', space=vmem, size = 0x10000, scoped, tag = 'output window, operand 0']
    %10 = vsyncpa [#allocation3], 0
    %s11 = scalar_lea.sflag [#allocation3], 1
    %12 = vsyncpa %s11, 0
    %13 = vsyncpa [#allocation6], 0
    %s14 = scalar_lea.sflag [#allocation6], 1
    %15 = vsyncpa %s14, 0
    %16 = vsyncpa [#allocation4], 0
    %s17 = scalar_lea.sflag [#allocation4], 1
    %18 = vsyncpa %s17, 0
    loop: start=0, step=1, limit=4
    $region2: #{tpu_custom_call.1} parent=1 // loop_pre_header
      _
    $region3: #{tpu_custom_call.1} parent=1 // loop_header
      %s20 = sphi 0, %s24
      %p21 = scmp.ge.s32.totalorder %s20, 4
      %s27 = sphi 0, %s39
      %s28 = sphi 0, %s35
      %s29 = sphi 0, %s27
      %s30 = sphi 0, %s28
      %s31 = sphi 0, %s29
      %s32 = sphi 0, %s30
      %s44 = sphi 0, %s46
      %s47 = sphi 0, %s44
      %s48 = sphi 0, %s47
      %s64 = sphi 0, %s48
      %s80 = sphi 0, %s82
      %s83 = sphi 0, %s80
      %s84 = sphi 0, %s83
      %s100 = sphi 0, %s84
      %s116 = sphi 0, %s118
      %s119 = sphi 0, %s116
      %s120 = sphi 0, %s119
      %s136 = sphi 0, %s120
      %s140 = sphi 0, %s140
      %s142 = sphi 0, %s140
      %s143 = sphi 0, %s142
      %s157 = sphi 0, %s143
      %s161 = sphi 0, %s161
      %s163 = sphi 0, %s161
      %s164 = sphi 0, %s163
      %s178 = sphi 0, %s164
      %s186 = sphi 0, %s188
      %s189 = sphi 0, %s186
      %s190 = sphi 0, %s189
      %s206 = sphi 0, %s190
    $region4: #{tpu_custom_call.1} parent=1 // loop_header_branch
      %23 = sbr.rel (%p21) target = $region8
    $region5: #{tpu_custom_call.1} parent=1 // loop_body
      %s25 = ssub.s32 %s20, 1
      %s26 = ssub.s32 %s20, 2
      %s33 = sadd.s32 1, %s28
      %p34 = scmp.ge.s32.totalorder %s33, 1
      %s35 = scalar_select %p34, 0, %s33
      %s36 = sadd.s32 1, %s27
      %s37 = scalar_select %p34, %s36, %s27
      %p38 = scmp.ge.s32.totalorder %s37, 2
      %s39 = scalar_select %p38, 0, %s37
      %s40 = ssub.s32 %s27, %s39
      %s41 = ssub.s32 %s28, %s35
      %s42 = sor.u32 %s40, %s41
      %p43 = scmp.eq.s32.totalorder %s42, 0
      %s45 = sadd.s32 %s44, 1
      %s46 = scalar_select %p43, %s44, %s45
      %p49 = pneg %p43
      %p50 = scmp.eq.s32.totalorder %s20, 1
      %p51 = por %p49, %p50
      %p52 = scmp.ne.s32.totalorder %s44, %s47
      %p53 = scmp.eq.s32.totalorder %s20, 0
      %p54 = por %p52, %p53
      %p55 = scmp.ne.s32.totalorder %s44, %s47
      %p56 = scmp.eq.s32.totalorder %s25, 1
      %p57 = por %p55, %p56
      %p58 = scmp.ne.s32.totalorder %s47, %s48
      %p59 = scmp.eq.s32.totalorder %s25, 0
      %p60 = por %p58, %p59
      %p61 = scmp.ne.s32.totalorder %s47, %s48
      %p62 = scmp.eq.s32.totalorder %s26, 1
      %p63 = por %p61, %p62
      %p65 = scmp.ne.s32.totalorder %s48, %s64
      %p66 = scmp.eq.s32.totalorder %s26, 0
      %p67 = por %p65, %p66
      %s68 = smul.u32 %s28, 8
      %s69 = ssub.s32 %s68, 1
      %p70 = scmp.gt.s32.totalorder %s69, 0
      %s71 = scalar_select %p70, %s69, 0
      %s72 = smul.u32 %s35, 8
      %s73 = ssub.s32 %s72, 1
      %p74 = scmp.gt.s32.totalorder %s73, 0
      %s75 = scalar_select %p74, %s73, 0
      %s76 = ssub.s32 %s27, %s39
      %s77 = ssub.s32 %s71, %s75
      %s78 = sor.u32 %s76, %s77
      %p79 = scmp.eq.s32.totalorder %s78, 0
      %s81 = sadd.s32 %s80, 1
      %s82 = scalar_select %p79, %s80, %s81
      %p85 = pneg %p79
      %p86 = scmp.eq.s32.totalorder %s20, 1
      %p87 = por %p85, %p86
      %p88 = scmp.ne.s32.totalorder %s80, %s83
      %p89 = scmp.eq.s32.totalorder %s20, 0
      %p90 = por %p88, %p89
      %p91 = scmp.ne.s32.totalorder %s80, %s83
      %p92 = scmp.eq.s32.totalorder %s25, 1
      %p93 = por %p91, %p92
      %p94 = scmp.ne.s32.totalorder %s83, %s84
      %p95 = scmp.eq.s32.totalorder %s25, 0
      %p96 = por %p94, %p95
      %p97 = scmp.ne.s32.totalorder %s83, %s84
      %p98 = scmp.eq.s32.totalorder %s26, 1
      %p99 = por %p97, %p98
      %p101 = scmp.ne.s32.totalorder %s84, %s100
      %p102 = scmp.eq.s32.totalorder %s26, 0
      %p103 = por %p101, %p102
      %s104 = sadd.s32 %s28, 1
      %s105 = smul.u32 %s104, 8
      %p106 = scmp.lt.s32.totalorder %s105, 7
      %s107 = scalar_select %p106, %s105, 7
      %s108 = sadd.s32 %s35, 1
      %s109 = smul.u32 %s108, 8
      %p110 = scmp.lt.s32.totalorder %s109, 7
      %s111 = scalar_select %p110, %s109, 7
      %s112 = ssub.s32 %s27, %s39
      %s113 = ssub.s32 %s107, %s111
      %s114 = sor.u32 %s112, %s113
      %p115 = scmp.eq.s32.totalorder %s114, 0
      %s117 = sadd.s32 %s116, 1
      %s118 = scalar_select %p115, %s116, %s117
      %p121 = pneg %p115
      %p122 = scmp.eq.s32.totalorder %s20, 1
      %p123 = por %p121, %p122
      %p124 = scmp.ne.s32.totalorder %s116, %s119
      %p125 = scmp.eq.s32.totalorder %s20, 0
      %p126 = por %p124, %p125
      %p127 = scmp.ne.s32.totalorder %s116, %s119
      %p128 = scmp.eq.s32.totalorder %s25, 1
      %p129 = por %p127, %p128
      %p130 = scmp.ne.s32.totalorder %s119, %s120
      %p131 = scmp.eq.s32.totalorder %s25, 0
      %p132 = por %p130, %p131
      %p133 = scmp.ne.s32.totalorder %s119, %s120
      %p134 = scmp.eq.s32.totalorder %s26, 1
      %p135 = por %p133, %p134
      %p137 = scmp.ne.s32.totalorder %s120, %s136
      %p138 = scmp.eq.s32.totalorder %s26, 0
      %p139 = por %p137, %p138
      %s141 = sadd.s32 %s140, 1
      %p144 = scmp.eq.s32.totalorder %s20, 1
      %p145 = scmp.ne.s32.totalorder %s140, %s142
      %p146 = scmp.eq.s32.totalorder %s20, 0
      %p147 = por %p145, %p146
      %p148 = scmp.ne.s32.totalorder %s140, %s142
      %p149 = scmp.eq.s32.totalorder %s25, 1
      %p150 = por %p148, %p149
      %p151 = scmp.ne.s32.totalorder %s142, %s143
      %p152 = scmp.eq.s32.totalorder %s25, 0
      %p153 = por %p151, %p152
      %p154 = scmp.ne.s32.totalorder %s142, %s143
      %p155 = scmp.eq.s32.totalorder %s26, 1
      %p156 = por %p154, %p155
      %p158 = scmp.ne.s32.totalorder %s143, %s157
      %p159 = scmp.eq.s32.totalorder %s26, 0
      %p160 = por %p158, %p159
      %s162 = sadd.s32 %s161, 1
      %p165 = scmp.eq.s32.totalorder %s20, 1
      %p166 = scmp.ne.s32.totalorder %s161, %s163
      %p167 = scmp.eq.s32.totalorder %s20, 0
      %p168 = por %p166, %p167
      %p169 = scmp.ne.s32.totalorder %s161, %s163
      %p170 = scmp.eq.s32.totalorder %s25, 1
      %p171 = por %p169, %p170
      %p172 = scmp.ne.s32.totalorder %s163, %s164
      %p173 = scmp.eq.s32.totalorder %s25, 0
      %p174 = por %p172, %p173
      %p175 = scmp.ne.s32.totalorder %s163, %s164
      %p176 = scmp.eq.s32.totalorder %s26, 1
      %p177 = por %p175, %p176
      %p179 = scmp.ne.s32.totalorder %s164, %s178
      %p180 = scmp.eq.s32.totalorder %s26, 0
      %p181 = por %p179, %p180
      %s182 = ssub.s32 %s27, %s39
      %s183 = ssub.s32 %s28, %s35
      %s184 = sor.u32 %s182, %s183
      %p185 = scmp.eq.s32.totalorder %s184, 0
      %s187 = sadd.s32 %s186, 1
      %s188 = scalar_select %p185, %s186, %s187
      %p191 = pneg %p185
      %p192 = scmp.eq.s32.totalorder %s20, 1
      %p193 = por %p191, %p192
      %p194 = scmp.ne.s32.totalorder %s186, %s189
      %p195 = scmp.eq.s32.totalorder %s20, 0
      %p196 = por %p194, %p195
      %p197 = scmp.ne.s32.totalorder %s186, %s189
      %p198 = scmp.eq.s32.totalorder %s25, 1
      %p199 = por %p197, %p198
      %p200 = scmp.ne.s32.totalorder %s189, %s190
      %p201 = scmp.eq.s32.totalorder %s25, 0
      %p202 = por %p200, %p201
      %p203 = scmp.ne.s32.totalorder %s189, %s190
      %p204 = scmp.eq.s32.totalorder %s26, 1
      %p205 = por %p203, %p204
      %p207 = scmp.ne.s32.totalorder %s190, %s206
      %p208 = scmp.eq.s32.totalorder %s26, 0
      %p209 = por %p207, %p208
      %p210 = scmp.le.s32.totalorder 1, %s20
      %p211 = scmp.lt.s32.totalorder %s20, 3
      %p212 = pnand %p210, %p211
      %p213 = pneg %p212
      // Predicated region
      $region9: #{tpu_custom_call.1} parent=5 // pred_check
        _
      $region10: #{tpu_custom_call.1} parent=5 // pred_check_branch
        %215 = sbr.rel (%p212) target = $region12
      $region11: #{tpu_custom_call.1} parent=5 // pred_region
        %s216 = ssub.s32 %s20, 1
        // Predicated region
        $region13: #{tpu_custom_call.1} parent=11 // pred_check
          %p217 = pneg %p153
        $region14: #{tpu_custom_call.1} parent=11 // pred_check_branch
          %219 = sbr.rel (%p217) target = $region16
        $region15: #{tpu_custom_call.1} parent=11 // pred_region
          _
        $region16: #{tpu_custom_call.1} parent=11 // pred_fallthru
          _
        // Predicated region
        $region17: #{tpu_custom_call.1} parent=11 // pred_check
          %p220 = pneg %p174
        $region18: #{tpu_custom_call.1} parent=11 // pred_check_branch
          %222 = sbr.rel (%p220) target = $region20
        $region19: #{tpu_custom_call.1} parent=11 // pred_region
          _
        $region20: #{tpu_custom_call.1} parent=11 // pred_fallthru
          _
      $region12: #{tpu_custom_call.1} parent=5 // pred_fallthru
        _
      %p223 = scmp.lt.s32.totalorder %s20, 2
      // Predicated region
      $region21: #{tpu_custom_call.1} parent=5 // pred_check
        %p224 = pneg %p223
      $region22: #{tpu_custom_call.1} parent=5 // pred_check_branch
        %226 = sbr.rel (%p224) target = $region24
      $region23: #{tpu_custom_call.1} parent=5 // pred_region
        // Predicated region
        $region25: #{tpu_custom_call.1} parent=23 // pred_check
          %p227 = pneg %p54
        $region26: #{tpu_custom_call.1} parent=23 // pred_check_branch
          %229 = sbr.rel (%p227) target = $region28
        $region27: #{tpu_custom_call.1} parent=23 // pred_region
          %s230 = sand.u32 %s44, 1
          %s231 = scalar_lea.sflag [#allocation3], %s230
          %s232 = sand.u32 %s44, 1
          %s233 = smul.addr %s232, 64
          %s234 = scalar_lea.vmem [#allocation2], %s233
          %s235 = smul.u32 8, %s28
          %s237 = ssub.s32 1024, 1024
          %238 = vsyncadd %s231, %s237
          %s239 = smul.addr %s27, 8
          %s240 = sadd.s32 %s235, %s239
          %s241 = smul.addr %s240, 128
          %s242 = scalar_lea.hbm %s0, %s241
          %s244 = sshll.u32 %s234, 4
          %s245 = int_to_ptr.vmem [resolvable:$true] %s244
          %247 = dma.hbm_to_vmem [thread:$0]  %s242, 1024, %s245, %s231
        $region28: #{tpu_custom_call.1} parent=23 // pred_fallthru
          _
        // Predicated region
        $region29: #{tpu_custom_call.1} parent=23 // pred_check
          %p248 = pneg %p90
        $region30: #{tpu_custom_call.1} parent=23 // pred_check_branch
          %250 = sbr.rel (%p248) target = $region32
        $region31: #{tpu_custom_call.1} parent=23 // pred_region
          %s251 = sand.u32 %s20, 1
          %s252 = scalar_lea.sflag [#allocation6], %s251
          %s253 = sand.u32 %s80, 1
          %s254 = smul.addr %s253, 8
          %s255 = scalar_lea.vmem [#allocation5], %s254
          %s256 = smul.u32 %s28, 8
          %s257 = ssub.s32 %s256, 1
          %p258 = scmp.gt.s32.totalorder %s257, 0
          %s259 = scalar_select %p258, %s257, 0
          %s261 = ssub.s32 128, 128
          %262 = vsyncadd %s252, %s261
          %s263 = smul.addr %s27, 8
          %s264 = sadd.s32 %s259, %s263
          %s265 = smul.addr %s264, 128
          %s266 = scalar_lea.hbm %s1, %s265
          %s268 = sshll.u32 %s255, 4
          %s269 = int_to_ptr.vmem [resolvable:$true] %s268
          %271 = dma.hbm_to_vmem [thread:$0]  %s266, 128, %s269, %s252
        $region32: #{tpu_custom_call.1} parent=23 // pred_fallthru
          _
        // Predicated region
        $region33: #{tpu_custom_call.1} parent=23 // pred_check
          %p272 = pneg %p126
        $region34: #{tpu_custom_call.1} parent=23 // pred_check_branch
          %274 = sbr.rel (%p272) target = $region36
        $region35: #{tpu_custom_call.1} parent=23 // pred_region
          %s275 = sand.u32 %s20, 1
          %s276 = scalar_lea.sflag [#allocation6], %s275
          %s277 = sand.u32 %s116, 1
          %s278 = smul.addr %s277, 8
          %s279 = scalar_lea.vmem [#allocation7], %s278
          %s280 = sadd.s32 %s28, 1
          %s281 = smul.u32 %s280, 8
          %p282 = scmp.lt.s32.totalorder %s281, 7
          %s283 = scalar_select %p282, %s281, 7
          %s285 = ssub.s32 128, 128
          %286 = vsyncadd %s276, %s285
          %s287 = smul.addr %s27, 8
          %s288 = sadd.s32 %s283, %s287
          %s289 = smul.addr %s288, 128
          %s290 = scalar_lea.hbm %s2, %s289
          %s292 = sshll.u32 %s279, 4
          %s293 = int_to_ptr.vmem [resolvable:$true] %s292
          %295 = dma.hbm_to_vmem [thread:$0]  %s290, 128, %s293, %s276
        $region36: #{tpu_custom_call.1} parent=23 // pred_fallthru
          _
      $region24: #{tpu_custom_call.1} parent=5 // pred_fallthru
        _
      %p296 = scmp.le.s32.totalorder 1, %s20
      %p297 = scmp.lt.s32.totalorder %s20, 3
      %p298 = pnand %p296, %p297
      %p299 = pneg %p298
      // Predicated region
      $region37: #{tpu_custom_call.1} parent=5 // pred_check
        _
      $region38: #{tpu_custom_call.1} parent=5 // pred_check_branch
        %301 = sbr.rel (%p298) target = $region40
      $region39: #{tpu_custom_call.1} parent=5 // pred_region
        %s302 = ssub.s32 %s20, 1
        %s303 = sand.u32 %s47, 1
        %s304 = scalar_lea.sflag [#allocation3], %s303
        %s305 = sand.u32 %s47, 1
        %s306 = smul.addr %s305, 64
        %s307 = scalar_lea.vmem [#allocation2], %s306
        // Predicated region
        $region41: #{tpu_custom_call.1} parent=39 // pred_check
          %p308 = pneg %p60
        $region42: #{tpu_custom_call.1} parent=39 // pred_check_branch
          %310 = sbr.rel (%p308) target = $region44
        $region43: #{tpu_custom_call.1} parent=39 // pred_region
          %311 = dma.done %s304, 1024
        $region44: #{tpu_custom_call.1} parent=39 // pred_fallthru
          _
        %s312 = sand.u32 %s25, 1
        %s313 = scalar_lea.sflag [#allocation6], %s312
        %s314 = sand.u32 %s83, 1
        %s315 = smul.addr %s314, 8
        %s316 = scalar_lea.vmem [#allocation5], %s315
        // Predicated region
        $region45: #{tpu_custom_call.1} parent=39 // pred_check
          %p317 = pneg %p96
        $region46: #{tpu_custom_call.1} parent=39 // pred_check_branch
          %319 = sbr.rel (%p317) target = $region48
        $region47: #{tpu_custom_call.1} parent=39 // pred_region
          %320 = dma.done %s313, 128
        $region48: #{tpu_custom_call.1} parent=39 // pred_fallthru
          _
        %s321 = sand.u32 %s25, 1
        %s322 = scalar_lea.sflag [#allocation6], %s321
        %s323 = sand.u32 %s119, 1
        %s324 = smul.addr %s323, 8
        %s325 = scalar_lea.vmem [#allocation7], %s324
        // Predicated region
        $region49: #{tpu_custom_call.1} parent=39 // pred_check
          %p326 = pneg %p132
        $region50: #{tpu_custom_call.1} parent=39 // pred_check_branch
          %328 = sbr.rel (%p326) target = $region52
        $region51: #{tpu_custom_call.1} parent=39 // pred_region
          %329 = dma.done %s322, 128
        $region52: #{tpu_custom_call.1} parent=39 // pred_fallthru
          _
        %s330 = sand.u32 %s47, 1
        %s331 = scalar_lea.sflag [#allocation3], %s330
        %s332 = sand.u32 %s47, 1
        %s333 = smul.addr %s332, 64
        %s334 = scalar_lea.vmem [#allocation2], %s333
        %p335 = pneg %p60
        %p336 = pneg %p57
        %s337 = sand.u32 %s25, 1
        %s338 = scalar_lea.sflag [#allocation6], %s337
        %s339 = sand.u32 %s83, 1
        %s340 = smul.addr %s339, 8
        %s341 = scalar_lea.vmem [#allocation5], %s340
        %p342 = pneg %p96
        %p343 = pneg %p93
        %s344 = sand.u32 %s25, 1
        %s345 = scalar_lea.sflag [#allocation6], %s344
        %s346 = sand.u32 %s119, 1
        %s347 = smul.addr %s346, 8
        %s348 = scalar_lea.vmem [#allocation7], %s347
        %p349 = pneg %p132
        %p350 = pneg %p129
        %p351 = pneg %p153
        %p352 = pneg %p150
        %p353 = pneg %p174
        %p354 = pneg %p171
        %p355 = pneg %p202
        %p356 = pneg %p199
        %s357 = sand.u32 %s189, 1
        %s358 = scalar_lea.sflag [#allocation4], %s357
        %s359 = sand.u32 %s189, 1
        %s360 = smul.addr %s359, 64
        %s361 = scalar_lea.vmem [#allocation8], %s360
        %s362 = smul.u32 8, %s30
        %s363 = smul.u32 %s30, 8
        %s364 = ssub.s32 %s363, 1
        %p365 = scmp.gt.s32.totalorder %s364, 0
        %s366 = scalar_select %p365, %s364, 0
        %s367 = sadd.s32 %s30, 1
        %s368 = smul.u32 %s367, 8
        %p369 = scmp.lt.s32.totalorder %s368, 7
        %s370 = scalar_select %p369, %s368, 7
        %s371 = smul.u32 8, %s30
        %v372 = vld [vmem:[%s307] sm:$0xff]
        %v373 = vld [vmem:[%s307 + $0x8] sm:$0xff]
        %v374 = vld [vmem:[%s307 + $0x10] sm:$0xff]
        %v375 = vld [vmem:[%s307 + $0x18] sm:$0xff]
        %v376 = vld [vmem:[%s307 + $0x20] sm:$0xff]
        %v377 = vld [vmem:[%s307 + $0x28] sm:$0xff]
        %v378 = vld [vmem:[%s307 + $0x30] sm:$0xff]
        %v379 = vld [vmem:[%s307 + $0x38] sm:$0xff]
        %v380 = vld [vmem:[%s316] sm:$0xff]
        %v381 = vld [vmem:[%s325] sm:$0xff]
        %p382 = scmp.gt.s32.totalorder %s30, 0
        %s383 = scalar_select %p382, 1, 0
        %v384 = vstv %s383
        %vm385 = vcmp.eq.s32.totalorder %v384, 1
        %v386 = vsel %vm385, %v380, 0.0
        %p387 = scmp.lt.s32.totalorder %s30, 0
        %s388 = scalar_select %p387, 1, 0
        %v389 = vstv %s388
        %vm390 = vcmp.eq.s32.totalorder %v389, 1
        %v391 = vsel %vm390, %v381, 0.0
        %v392 = vlaneseq
        %v393 = vand.u32 %v392, 127
        %394 = vrot.lane.b32.xlu0 %v372, 1
        %v395 = vpop.permute.xlu0 %394
        %396 = vrot.lane.b32.xlu0 %v373, 1
        %v397 = vpop.permute.xlu0 %396
        %398 = vrot.lane.b32.xlu0 %v374, 1
        %v399 = vpop.permute.xlu0 %398
        %400 = vrot.lane.b32.xlu0 %v375, 1
        %v401 = vpop.permute.xlu0 %400
        %402 = vrot.lane.b32.xlu0 %v376, 1
        %v403 = vpop.permute.xlu0 %402
        %404 = vrot.lane.b32.xlu0 %v377, 1
        %v405 = vpop.permute.xlu0 %404
        %406 = vrot.lane.b32.xlu0 %v378, 1
        %v407 = vpop.permute.xlu0 %406
        %408 = vrot.lane.b32.xlu0 %v379, 1
        %v409 = vpop.permute.xlu0 %408
        %vm410 = vcmp.lt.s32.totalorder %v393, 1
        %v411 = vsel %vm410, %v407, %v409
        %v412 = vsel %vm410, %v405, %v407
        %v413 = vsel %vm410, %v403, %v405
        %v414 = vsel %vm410, %v401, %v403
        %v415 = vsel %vm410, %v399, %v401
        %v416 = vsel %vm410, %v397, %v399
        %v417 = vsel %vm410, %v395, %v397
        %v418 = vsel %vm410, %v409, %v395
        %419 = vrot.lane.b32.xlu0 %v386, 1
        %v420 = vpop.permute.xlu0 %419
        %v421 = vsel %vm410, %v420, %v418
        %422 = vrot.lane.b32.xlu0 %v372, 127
        %v423 = vpop.permute.xlu0 %422
        %424 = vrot.lane.b32.xlu0 %v373, 127
        %v425 = vpop.permute.xlu0 %424
        %426 = vrot.lane.b32.xlu0 %v374, 127
        %v427 = vpop.permute.xlu0 %426
        %428 = vrot.lane.b32.xlu0 %v375, 127
        %v429 = vpop.permute.xlu0 %428
        %430 = vrot.lane.b32.xlu0 %v376, 127
        %v431 = vpop.permute.xlu0 %430
        %432 = vrot.lane.b32.xlu0 %v377, 127
        %v433 = vpop.permute.xlu0 %432
        %434 = vrot.lane.b32.xlu0 %v378, 127
        %v435 = vpop.permute.xlu0 %434
        %436 = vrot.lane.b32.xlu0 %v379, 127
        %v437 = vpop.permute.xlu0 %436
        %vm438 = vcmp.lt.s32.totalorder %v393, 127
        %v439 = vsel %vm438, %v435, %v437
        %v440 = vsel %vm438, %v433, %v435
        %v441 = vsel %vm438, %v431, %v433
        %v442 = vsel %vm438, %v429, %v431
        %v443 = vsel %vm438, %v427, %v429
        %v444 = vsel %vm438, %v425, %v427
        %v445 = vsel %vm438, %v423, %v425
        %v446 = vsel %vm438, %v437, %v423
        %447 = vrot.lane.b32.xlu0 %v391, 127
        %v448 = vpop.permute.xlu0 %447
        %vm449 = vcmp.ge.s32.totalorder %v393, 127
        %v450 = vsel %vm449, %v448, %v446
        %v451 = vld [vmem:[%s3] sm:$0xff]
        %v452 = vld [vmem:[%s4] sm:$0xff]
        %454 = vset.pattern.permute.xlu0 0
        %455 = vperm.xlu0 %454, %v452
        %v456 = vpop.permute.xlu0 %455
        %vm458 = vcmask 195584
        %v460 = vsel %vm458, %v451, 0
        %462 = vmatprep.subr.mxu0 0.0
        %463 = vmatpush1.msra.mxu0 0.0
        %464 = vmatprep.subr.mxu0 0.0
        %465 = vmatpush1.msra.mxu0 0.0
        %466 = vmatprep.subr.mxu0 0.0
        %467 = vmatpush1.msra.mxu0 0.0
        %468 = vmatprep.subr.mxu0 0.0
        %469 = vmatpush1.msra.mxu0 0.0
        %470 = vmatprep.subr.mxu0 0.0
        %471 = vmatpush1.msra.mxu0 0.0
        %472 = vmatprep.subr.mxu0 0.0
        %473 = vmatpush1.msra.mxu0 0.0
        %474 = vmatprep.subr.mxu0 0.0
        %475 = vmatpush1.msra.mxu0 0.0
        %476 = vmatprep.subr.mxu0 0.0
        %477 = vmatpush1.msra.mxu0 0.0
        %478 = vmatprep.subr.mxu0 0.0
        %479 = vmatpush1.msra.mxu0 0.0
        %480 = vmatprep.subr.mxu0 0.0
        %481 = vmatpush1.msra.mxu0 0.0
        %482 = vmatprep.subr.mxu0 0.0
        %483 = vmatpush1.msra.mxu0 0.0
        %484 = vmatprep.subr.mxu0 0.0
        %485 = vmatpush1.msra.mxu0 0.0
        %486 = vmatprep.subr.mxu0 0.0
        %487 = vmatpush1.msra.mxu0 0.0
        %488 = vmatprep.subr.mxu0 %v444
        %489 = vmatpush1.msra.mxu0 %v445
        %490 = vmatprep.subr.mxu0 %v373
        %491 = vmatpush1.msra.mxu0 %v372
        %492 = vmatprep.subr.mxu0 %v417
        %493 = vmatpush1.msra.mxu0 %v421
        %494 = vmatprep.subr.mxu0 0.0
        %495 = vmatpush2.msra.mxu0 0.0
        %496 = vmatprep.subr.mxu0 0.0
        %497 = vmatpush2.msra.mxu0 0.0
        %498 = vmatprep.subr.mxu0 0.0
        %499 = vmatpush2.msra.mxu0 0.0
        %500 = vmatprep.subr.mxu0 0.0
        %501 = vmatpush2.msra.mxu0 0.0
        %502 = vmatprep.subr.mxu0 0.0
        %503 = vmatpush2.msra.mxu0 0.0
        %504 = vmatprep.subr.mxu0 0.0
        %505 = vmatpush2.msra.mxu0 0.0
        %506 = vmatprep.subr.mxu0 0.0
        %507 = vmatpush2.msra.mxu0 0.0
        %508 = vmatprep.subr.mxu0 0.0
        %509 = vmatpush2.msra.mxu0 0.0
        %510 = vmatprep.subr.mxu0 0.0
        %511 = vmatpush2.msra.mxu0 0.0
        %512 = vmatprep.subr.mxu0 0.0
        %513 = vmatpush2.msra.mxu0 0.0
        %514 = vmatprep.subr.mxu0 0.0
        %515 = vmatpush2.msra.mxu0 0.0
        %516 = vmatprep.subr.mxu0 0.0
        %517 = vmatpush2.msra.mxu0 0.0
        %518 = vmatprep.subr.mxu0 0.0
        %519 = vmatpush2.msra.mxu0 0.0
        %520 = vmatprep.subr.mxu0 0.0
        %521 = vmatpush2.msra.mxu0 0.0
        %522 = vmatprep.subr.mxu0 0.0
        %523 = vmatpush2.msra.mxu0 0.0
        %524 = vmatprep.subr.mxu0 0.0
        %525 = vmatpush2.msra.mxu0 0.0
        %526 = vmatprep.mubr.f32.mxu0 0.0
        %527 = vmatmul.mubr.f32.gmra.mxu0 %v460
        %v528 = vpop.f32.mrf.mxu0
        %v529 = vadd.f32 %v456, %v528
        %v530 = vpop.f32.mrf.mxu0
        %v531 = vadd.f32 %v456, %v530
        %532 = vdwg.mxu0
        %533 = vmatprep.subr.mxu0 0.0
        %534 = vmatpush1.msra.mxu0 0.0
        %535 = vmatprep.subr.mxu0 0.0
        %536 = vmatpush1.msra.mxu0 0.0
        %537 = vmatprep.subr.mxu0 0.0
        %538 = vmatpush1.msra.mxu0 0.0
        %539 = vmatprep.subr.mxu0 0.0
        %540 = vmatpush1.msra.mxu0 0.0
        %541 = vmatprep.subr.mxu0 0.0
        %542 = vmatpush1.msra.mxu0 0.0
        %543 = vmatprep.subr.mxu0 0.0
        %544 = vmatpush1.msra.mxu0 0.0
        %545 = vmatprep.subr.mxu0 0.0
        %546 = vmatpush1.msra.mxu0 0.0
        %547 = vmatprep.subr.mxu0 0.0
        %548 = vmatpush1.msra.mxu0 0.0
        %549 = vmatprep.subr.mxu0 0.0
        %550 = vmatpush1.msra.mxu0 0.0
        %551 = vmatprep.subr.mxu0 0.0
        %552 = vmatpush1.msra.mxu0 0.0
        %553 = vmatprep.subr.mxu0 0.0
        %554 = vmatpush1.msra.mxu0 0.0
        %555 = vmatprep.subr.mxu0 0.0
        %556 = vmatpush1.msra.mxu0 0.0
        %557 = vmatprep.subr.mxu0 0.0
        %558 = vmatpush1.msra.mxu0 0.0
        %559 = vmatprep.subr.mxu0 %v442
        %560 = vmatpush1.msra.mxu0 %v443
        %561 = vmatprep.subr.mxu0 %v375
        %562 = vmatpush1.msra.mxu0 %v374
        %563 = vmatprep.subr.mxu0 %v415
        %564 = vmatpush1.msra.mxu0 %v416
        %565 = vmatprep.subr.mxu0 0.0
        %566 = vmatpush2.msra.mxu0 0.0
        %567 = vmatprep.subr.mxu0 0.0
        %568 = vmatpush2.msra.mxu0 0.0
        %569 = vmatprep.subr.mxu0 0.0
        %570 = vmatpush2.msra.mxu0 0.0
        %571 = vmatprep.subr.mxu0 0.0
        %572 = vmatpush2.msra.mxu0 0.0
        %573 = vmatprep.subr.mxu0 0.0
        %574 = vmatpush2.msra.mxu0 0.0
        %575 = vmatprep.subr.mxu0 0.0
        %576 = vmatpush2.msra.mxu0 0.0
        %577 = vmatprep.subr.mxu0 0.0
        %578 = vmatpush2.msra.mxu0 0.0
        %579 = vmatprep.subr.mxu0 0.0
        %580 = vmatpush2.msra.mxu0 0.0
        %581 = vmatprep.subr.mxu0 0.0
        %582 = vmatpush2.msra.mxu0 0.0
        %583 = vmatprep.subr.mxu0 0.0
        %584 = vmatpush2.msra.mxu0 0.0
        %585 = vmatprep.subr.mxu0 0.0
        %586 = vmatpush2.msra.mxu0 0.0
        %587 = vmatprep.subr.mxu0 0.0
        %588 = vmatpush2.msra.mxu0 0.0
        %589 = vmatprep.subr.mxu0 0.0
        %590 = vmatpush2.msra.mxu0 0.0
        %591 = vmatprep.subr.mxu0 0.0
        %592 = vmatpush2.msra.mxu0 0.0
        %593 = vmatprep.subr.mxu0 0.0
        %594 = vmatpush2.msra.mxu0 0.0
        %595 = vmatprep.subr.mxu0 0.0
        %596 = vmatpush2.msra.mxu0 0.0
        %597 = vmatprep.mubr.f32.mxu0 0.0
        %598 = vmatmul.mubr.f32.gmra.mxu0 %v460
        %v599 = vpop.f32.mrf.mxu0
        %v600 = vadd.f32 %v456, %v599
        %v601 = vpop.f32.mrf.mxu0
        %v602 = vadd.f32 %v456, %v601
        %603 = vdwg.mxu0
        %604 = vmatprep.subr.mxu0 0.0
        %605 = vmatpush1.msra.mxu0 0.0
        %606 = vmatprep.subr.mxu0 0.0
        %607 = vmatpush1.msra.mxu0 0.0
        %608 = vmatprep.subr.mxu0 0.0
        %609 = vmatpush1.msra.mxu0 0.0
        %610 = vmatprep.subr.mxu0 0.0
        %611 = vmatpush1.msra.mxu0 0.0
        %612 = vmatprep.subr.mxu0 0.0
        %613 = vmatpush1.msra.mxu0 0.0
        %614 = vmatprep.subr.mxu0 0.0
        %615 = vmatpush1.msra.mxu0 0.0
        %616 = vmatprep.subr.mxu0 0.0
        %617 = vmatpush1.msra.mxu0 0.0
        %618 = vmatprep.subr.mxu0 0.0
        %619 = vmatpush1.msra.mxu0 0.0
        %620 = vmatprep.subr.mxu0 0.0
        %621 = vmatpush1.msra.mxu0 0.0
        %622 = vmatprep.subr.mxu0 0.0
        %623 = vmatpush1.msra.mxu0 0.0
        %624 = vmatprep.subr.mxu0 0.0
        %625 = vmatpush1.msra.mxu0 0.0
        %626 = vmatprep.subr.mxu0 0.0
        %627 = vmatpush1.msra.mxu0 0.0
        %628 = vmatprep.subr.mxu0 0.0
        %629 = vmatpush1.msra.mxu0 0.0
        %630 = vmatprep.subr.mxu0 %v440
        %631 = vmatpush1.msra.mxu0 %v441
        %632 = vmatprep.subr.mxu0 %v377
        %633 = vmatpush1.msra.mxu0 %v376
        %634 = vmatprep.subr.mxu0 %v413
        %635 = vmatpush1.msra.mxu0 %v414
        %636 = vmatprep.subr.mxu0 0.0
        %637 = vmatpush2.msra.mxu0 0.0
        %638 = vmatprep.subr.mxu0 0.0
        %639 = vmatpush2.msra.mxu0 0.0
        %640 = vmatprep.subr.mxu0 0.0
        %641 = vmatpush2.msra.mxu0 0.0
        %642 = vmatprep.subr.mxu0 0.0
        %643 = vmatpush2.msra.mxu0 0.0
        %644 = vmatprep.subr.mxu0 0.0
        %645 = vmatpush2.msra.mxu0 0.0
        %646 = vmatprep.subr.mxu0 0.0
        %647 = vmatpush2.msra.mxu0 0.0
        %648 = vmatprep.subr.mxu0 0.0
        %649 = vmatpush2.msra.mxu0 0.0
        %650 = vmatprep.subr.mxu0 0.0
        %651 = vmatpush2.msra.mxu0 0.0
        %652 = vmatprep.subr.mxu0 0.0
        %653 = vmatpush2.msra.mxu0 0.0
        %654 = vmatprep.subr.mxu0 0.0
        %655 = vmatpush2.msra.mxu0 0.0
        %656 = vmatprep.subr.mxu0 0.0
        %657 = vmatpush2.msra.mxu0 0.0
        %658 = vmatprep.subr.mxu0 0.0
        %659 = vmatpush2.msra.mxu0 0.0
        %660 = vmatprep.subr.mxu0 0.0
        %661 = vmatpush2.msra.mxu0 0.0
        %662 = vmatprep.subr.mxu0 0.0
        %663 = vmatpush2.msra.mxu0 0.0
        %664 = vmatprep.subr.mxu0 0.0
        %665 = vmatpush2.msra.mxu0 0.0
        %666 = vmatprep.subr.mxu0 0.0
        %667 = vmatpush2.msra.mxu0 0.0
        %668 = vmatprep.mubr.f32.mxu0 0.0
        %669 = vmatmul.mubr.f32.gmra.mxu0 %v460
        %v670 = vpop.f32.mrf.mxu0
        %v671 = vadd.f32 %v456, %v670
        %v672 = vpop.f32.mrf.mxu0
        %v673 = vadd.f32 %v456, %v672
        %674 = vdwg.mxu0
        %675 = vmatprep.subr.mxu0 0.0
        %676 = vmatpush1.msra.mxu0 0.0
        %677 = vmatprep.subr.mxu0 0.0
        %678 = vmatpush1.msra.mxu0 0.0
        %679 = vmatprep.subr.mxu0 0.0
        %680 = vmatpush1.msra.mxu0 0.0
        %681 = vmatprep.subr.mxu0 0.0
        %682 = vmatpush1.msra.mxu0 0.0
        %683 = vmatprep.subr.mxu0 0.0
        %684 = vmatpush1.msra.mxu0 0.0
        %685 = vmatprep.subr.mxu0 0.0
        %686 = vmatpush1.msra.mxu0 0.0
        %687 = vmatprep.subr.mxu0 0.0
        %688 = vmatpush1.msra.mxu0 0.0
        %689 = vmatprep.subr.mxu0 0.0
        %690 = vmatpush1.msra.mxu0 0.0
        %691 = vmatprep.subr.mxu0 0.0
        %692 = vmatpush1.msra.mxu0 0.0
        %693 = vmatprep.subr.mxu0 0.0
        %694 = vmatpush1.msra.mxu0 0.0
        %695 = vmatprep.subr.mxu0 0.0
        %696 = vmatpush1.msra.mxu0 0.0
        %697 = vmatprep.subr.mxu0 0.0
        %698 = vmatpush1.msra.mxu0 0.0
        %699 = vmatprep.subr.mxu0 0.0
        %700 = vmatpush1.msra.mxu0 0.0
        %701 = vmatprep.subr.mxu0 %v450
        %702 = vmatpush1.msra.mxu0 %v439
        %703 = vmatprep.subr.mxu0 %v379
        %704 = vmatpush1.msra.mxu0 %v378
        %705 = vmatprep.subr.mxu0 %v411
        %706 = vmatpush1.msra.mxu0 %v412
        %707 = vmatprep.subr.mxu0 0.0
        %708 = vmatpush2.msra.mxu0 0.0
        %709 = vmatprep.subr.mxu0 0.0
        %710 = vmatpush2.msra.mxu0 0.0
        %711 = vmatprep.subr.mxu0 0.0
        %712 = vmatpush2.msra.mxu0 0.0
        %713 = vmatprep.subr.mxu0 0.0
        %714 = vmatpush2.msra.mxu0 0.0
        %715 = vmatprep.subr.mxu0 0.0
        %716 = vmatpush2.msra.mxu0 0.0
        %717 = vmatprep.subr.mxu0 0.0
        %718 = vmatpush2.msra.mxu0 0.0
        %719 = vmatprep.subr.mxu0 0.0
        %720 = vmatpush2.msra.mxu0 0.0
        %721 = vmatprep.subr.mxu0 0.0
        %722 = vmatpush2.msra.mxu0 0.0
        %723 = vmatprep.subr.mxu0 0.0
        %724 = vmatpush2.msra.mxu0 0.0
        %725 = vmatprep.subr.mxu0 0.0
        %726 = vmatpush2.msra.mxu0 0.0
        %727 = vmatprep.subr.mxu0 0.0
        %728 = vmatpush2.msra.mxu0 0.0
        %729 = vmatprep.subr.mxu0 0.0
        %730 = vmatpush2.msra.mxu0 0.0
        %731 = vmatprep.subr.mxu0 0.0
        %732 = vmatpush2.msra.mxu0 0.0
        %733 = vmatprep.subr.mxu0 0.0
        %734 = vmatpush2.msra.mxu0 0.0
        %735 = vmatprep.subr.mxu0 0.0
        %736 = vmatpush2.msra.mxu0 0.0
        %737 = vmatprep.subr.mxu0 0.0
        %738 = vmatpush2.msra.mxu0 0.0
        %739 = vmatprep.mubr.f32.mxu0 0.0
        %740 = vmatmul.mubr.f32.gmra.mxu0 %v460
        %v741 = vpop.f32.mrf.mxu0
        %v742 = vadd.f32 %v456, %v741
        %v743 = vpop.f32.mrf.mxu0
        %v744 = vadd.f32 %v456, %v743
        %745 = vdwg.mxu0
        %v746 = vadd.f32 %v529, %v372
        %v747 = vadd.f32 %v531, %v373
        %v748 = vadd.f32 %v600, %v374
        %v749 = vadd.f32 %v602, %v375
        %v750 = vadd.f32 %v671, %v376
        %v751 = vadd.f32 %v673, %v377
        %v752 = vadd.f32 %v742, %v378
        %v753 = vadd.f32 %v744, %v379
        %754 = vst [vmem:[%s361] sm:$0xff] %v746
        %755 = vst [vmem:[%s361 + $0x8] sm:$0xff] %v747
        %756 = vst [vmem:[%s361 + $0x10] sm:$0xff] %v748
        %757 = vst [vmem:[%s361 + $0x18] sm:$0xff] %v749
        %758 = vst [vmem:[%s361 + $0x20] sm:$0xff] %v750
        %759 = vst [vmem:[%s361 + $0x28] sm:$0xff] %v751
        %760 = vst [vmem:[%s361 + $0x30] sm:$0xff] %v752
        %761 = vst [vmem:[%s361 + $0x38] sm:$0xff] %v753
        %s762 = sand.u32 %s189, 1
        %s763 = scalar_lea.sflag [#allocation4], %s762
        %s764 = sand.u32 %s189, 1
        %s765 = smul.addr %s764, 64
        %s766 = scalar_lea.vmem [#allocation8], %s765
        // Predicated region
        $region53: #{tpu_custom_call.1} parent=39 // pred_check
          %p767 = pneg %p199
        $region54: #{tpu_custom_call.1} parent=39 // pred_check_branch
          %769 = sbr.rel (%p767) target = $region56
        $region55: #{tpu_custom_call.1} parent=39 // pred_region
          %s770 = smul.u32 8, %s30
          %s772 = ssub.s32 1024, 1024
          %773 = vsyncadd %s763, %s772
          %s774 = smul.addr %s29, 8
          %s775 = sadd.s32 %s770, %s774
          %s776 = smul.addr %s775, 128
          %s777 = scalar_lea.hbm %s5, %s776
          %s779 = sshll.u32 %s766, 4
          %s780 = int_to_ptr.vmem [resolvable:$true] %s779
          %782 = dma.vmem_to_hbm [thread:$0]  %s780, 1024, %s777, %s763
        $region56: #{tpu_custom_call.1} parent=39 // pred_fallthru
          _
      $region40: #{tpu_custom_call.1} parent=5 // pred_fallthru
        _
      %p783 = scmp.le.s32.totalorder 2, %s20
      // Predicated region
      $region57: #{tpu_custom_call.1} parent=5 // pred_check
        %p784 = pneg %p783
      $region58: #{tpu_custom_call.1} parent=5 // pred_check_branch
        %786 = sbr.rel (%p784) target = $region60
      $region59: #{tpu_custom_call.1} parent=5 // pred_region
        %s787 = ssub.s32 %s20, 2
        // Predicated region
        $region61: #{tpu_custom_call.1} parent=59 // pred_check
          %p788 = pneg %p205
        $region62: #{tpu_custom_call.1} parent=59 // pred_check_branch
          %790 = sbr.rel (%p788) target = $region64
        $region63: #{tpu_custom_call.1} parent=59 // pred_region
          %s791 = sand.u32 %s190, 1
          %s792 = scalar_lea.sflag [#allocation4], %s791
          %s793 = sand.u32 %s190, 1
          %s794 = smul.addr %s793, 64
          %s795 = scalar_lea.vmem [#allocation8], %s794
          %796 = dma.done %s792, 1024
        $region64: #{tpu_custom_call.1} parent=59 // pred_fallthru
          _
      $region60: #{tpu_custom_call.1} parent=5 // pred_fallthru
        _
    $region6: #{tpu_custom_call.1} parent=1 // loop_footer
      %s24 = sadd.s32 1, %s20
    $region7: #{tpu_custom_call.1} parent=1 // loop_footer_branch
      %19 = sbr.rel target = $region3
    $region8: #{tpu_custom_call.1} parent=1 // loop_exit
      _
    %797 = vsyncpa [#allocation3], 1
    %s798 = scalar_lea.sflag [#allocation3], 1
    %799 = vsyncpa %s798, 1
    %800 = vsyncpa [#allocation6], 1
    %s801 = scalar_lea.sflag [#allocation6], 1
    %802 = vsyncpa %s801, 1
    %803 = vsyncpa [#allocation4], 1
    %s804 = scalar_lea.sflag [#allocation4], 1
    %805 = vsyncpa %s804, 1

</llo_original>
